<compile_context>
chip_gen: v7x
topology: tpu7x:2x2x1
jax: 0.10.0
libtpu: 0.0.40
codegen_flags: <defaults>
</compile_context>

<pallas_src>
import jax
import jax.numpy as jnp
from jax.experimental import pallas as pl
from jax.experimental.pallas import tpu as pltpu


def _policy_kernel(ab_ref, xt_ref, w1t_ref, b1_ref, w2t_ref, b2_ref, o_ref):
    # fc1 on the MXU with batch on the lane axis: (h_pad, S) @ (S, tb).
    h = jnp.dot(w1t_ref[...], xt_ref[...], preferred_element_type=jnp.float32)
    # bias + ReLU on the VPU; zero-padded hidden rows stay exactly 0.
    h = jnp.maximum(h + b1_ref[...], 0.0)
    # fc2 on the MXU: (A, h_pad) @ (h_pad, tb) -> (A, tb).  A 128-deep
    # contraction with lane-dense output; no XLU cross-lane reduce.
    y = jnp.dot(w2t_ref[...], h, preferred_element_type=jnp.float32)
    y = y + b2_ref[...]
    # tanh on the EUP; scale by the SMEM scalar (runtime value, no recompile).
    o_ref[...] = jnp.tanh(y) * ab_ref[0, 0]


def _round_up(n, m):
    return ((n + m - 1) // m) * m


def policy_net_forward(x, w1, b1, w2, b2, action_bound, *, tb_max=8192):
    """x: (B, state_dim) f32 -> (B, action_dim) f32.

    w1: (state_dim, hidden), b1: (hidden,) or (1, hidden),
    w2: (hidden, action_dim), b2: (action_dim,) or (1, action_dim).
    """
    x = jnp.asarray(x, jnp.float32)
    batch, state_dim = x.shape
    hidden_dim, action_dim = w2.shape

    # --- Zero-pad the hidden dim up to the 128-lane width (exact math). ---
    h_pad = _round_up(max(hidden_dim, 128), 128)
    pad_h = h_pad - hidden_dim
    w1t = jnp.pad(jnp.asarray(w1, jnp.float32), ((0, 0), (0, pad_h))).T   # (h_pad, S)
    b1c = jnp.pad(jnp.asarray(b1, jnp.float32).reshape(1, hidden_dim),
                  ((0, 0), (0, pad_h))).T                                 # (h_pad, 1)
    w2t = jnp.pad(jnp.asarray(w2, jnp.float32), ((0, pad_h), (0, 0))).T   # (A, h_pad)
    b2c = jnp.asarray(b2, jnp.float32).reshape(action_dim, 1)             # (A, 1)

    # Batch-on-lanes orientation for the activations.
    xt = x.T                                                              # (S, B)

    # --- Batch tiling: weights resident, x^T/out tiles pipelined. ----------
    tb_max = max(128, (tb_max // 128) * 128)
    if batch < 256:
        tb = batch                    # single block == full lane extent (allowed)
    else:
        # >= 2 grid steps so ("parallel",) can split batch across both v7x
        # TensorCores; tiles are multiples of 128 lanes, capped at tb_max.
        tb = min(tb_max, _round_up(pl.cdiv(batch, 2), 128))
    grid = (pl.cdiv(batch, tb),)      # ragged last block masked by Pallas

    ab = jnp.full((1, 1), action_bound, dtype=jnp.float32)   # SMEM scalar

    cost = pl.CostEstimate(
        flops=2 * batch * (state_dim * h_pad + h_pad * action_dim),
        transcendentals=batch * action_dim,
        bytes_accessed=(xt.size + w1t.size + b1c.size + w2t.size + b2c.size
                        + batch * action_dim + 1) * 4,
    )

    out = pl.pallas_call(
        _policy_kernel,
        out_shape=jax.ShapeDtypeStruct((action_dim, batch), jnp.float32),
        grid=grid,
        in_specs=[
            pl.BlockSpec((1, 1), lambda i: (0, 0),
                         memory_space=pltpu.MemorySpace.SMEM),     # action_bound
            pl.BlockSpec((state_dim, tb), lambda i: (0, i)),       # x^T batch tile
            pl.BlockSpec((h_pad, state_dim), lambda i: (0, 0)),    # W1^T (resident)
            pl.BlockSpec((h_pad, 1), lambda i: (0, 0)),            # b1   (resident)
            pl.BlockSpec((action_dim, h_pad), lambda i: (0, 0)),   # W2^T (resident)
            pl.BlockSpec((action_dim, 1), lambda i: (0, 0)),       # b2   (resident)
        ],
        out_specs=pl.BlockSpec((action_dim, tb), lambda i: (0, i)),  # lane-dense
        compiler_params=pltpu.CompilerParams(
            dimension_semantics=("parallel",)),   # 2x on v7x dual TC; no-op v5e/v6e
        cost_estimate=cost,
    )(ab, xt, w1t, b1c, w2t, b2c)

    # (A, B) -> (B, A).  For A == 1 this is a pure reshape (no data movement).
    if action_dim == 1:
        return out.reshape(batch, 1)
    return out.T


def init_params(key, state_dim, hidden_dim, action_dim):
    """Deterministic init mimicking torch.nn.Linear default (U[-1/sqrt(fan_in), +])."""
    k1, k2, k3, k4 = jax.random.split(key, 4)
    bound1 = 1.0 / jnp.sqrt(jnp.float32(state_dim))
    bound2 = 1.0 / jnp.sqrt(jnp.float32(hidden_dim))
    w1 = jax.random.uniform(k1, (state_dim, hidden_dim), jnp.float32, -bound1, bound1)
    b1 = jax.random.uniform(k2, (1, hidden_dim), jnp.float32, -bound1, bound1)
    w2 = jax.random.uniform(k3, (hidden_dim, action_dim), jnp.float32, -bound2, bound2)
    b2 = jax.random.uniform(k4, (1, action_dim), jnp.float32, -bound2, bound2)
    return w1, b1, w2, b2


def _reference(x, w1, b1, w2, b2, action_bound):
    return jnp.tanh(jnp.maximum(x @ w1 + b1, 0.0) @ w2 + b2) * action_bound


if __name__ == "__main__":
    # Pendulum-v0: state_dim=3, action_dim=1, action_bound=2.0; hidden_dim=64.
    state_dim, hidden_dim, action_dim = 3, 64, 1
    action_bound = 2.0

    key = jax.random.PRNGKey(0)
    kx, kp, kb = jax.random.split(key, 3)
    w1, b1, w2, b2 = init_params(kp, state_dim, hidden_dim, action_dim)

    # Small, module-consistent shapes: batch=2 (single-block path).
    x_small = jax.random.normal(kx, (2, state_dim), dtype=jnp.float32)
    out_small = jax.block_until_ready(
        policy_net_forward(x_small, w1, b1, w2, b2, action_bound))
    ref_small = _reference(x_small, w1, b1, w2, b2, action_bound)
    assert out_small.shape == (2, action_dim)
    # MXU matmul pass precision is compiler-chosen; keep a conservative tol.
    assert jnp.allclose(out_small, ref_small, atol=1e-2, rtol=1e-2), \
        "mismatch vs reference (small batch)"

    # Larger batch exercising the multi-step grid + ragged masked last block
    # (B=1000 -> tb=512, grid=2; second block is ragged and masked on store).
    x_big = jax.random.normal(kb, (1000, state_dim), dtype=jnp.float32)
    out_big = jax.block_until_ready(
        policy_net_forward(x_big, w1, b1, w2, b2, action_bound))
    ref_big = _reference(x_big, w1, b1, w2, b2, action_bound)
    assert out_big.shape == (1000, action_dim)
    assert jnp.allclose(out_big, ref_big, atol=1e-2, rtol=1e-2), \
        "mismatch vs reference (large batch)"

    print("KERNEL_OK")
</pallas_src>

<mosaic_0001>
module attributes {stable_mosaic.version = 11 : i64} {
  func.func @_policy_kernel(%arg0: i32, %arg1: memref<1x1xf32, #tpu.memory_space<smem>>, %arg2: memref<3x2xf32, #tpu.memory_space<vmem>>, %arg3: memref<128x3xf32, #tpu.memory_space<vmem>>, %arg4: memref<128x1xf32, #tpu.memory_space<vmem>>, %arg5: memref<1x128xf32, #tpu.memory_space<vmem>>, %arg6: memref<1x1xf32, #tpu.memory_space<vmem>>, %arg7: memref<1x2xf32, #tpu.memory_space<vmem>>) attributes {dimension_semantics = [#tpu.dimension_semantics<parallel>], iteration_bounds = array<i64: 1>, scalar_prefetch = 0 : i64, scratch_operands = 0 : i64, tpu.core_type = #tpu.core_type<tc>, window_params = [{transform_indices = @transform_0, window_bounds = array<i64: 1, 1>}, {transform_indices = @transform_1, window_bounds = array<i64: 3, 2>}, {pipeline_mode = #tpu.pipeline_mode<synchronous>, transform_indices = @transform_2, window_bounds = array<i64: 128, 3>}, {pipeline_mode = #tpu.pipeline_mode<synchronous>, transform_indices = @transform_3, window_bounds = array<i64: 128, 1>}, {pipeline_mode = #tpu.pipeline_mode<synchronous>, transform_indices = @transform_4, window_bounds = array<i64: 1, 128>}, {pipeline_mode = #tpu.pipeline_mode<synchronous>, transform_indices = @transform_5, window_bounds = array<i64: 1, 1>}, {transform_indices = @transform_6, window_bounds = array<i64: 1, 2>}]} {
    %c0 = arith.constant 0 : index
    %c0_0 = arith.constant 0 : index
    %0 = vector.load %arg3[%c0, %c0_0] : memref<128x3xf32, #tpu.memory_space<vmem>>, vector<128x3xf32>
    %c0_1 = arith.constant 0 : index
    %c0_2 = arith.constant 0 : index
    %1 = vector.load %arg2[%c0_1, %c0_2] : memref<3x2xf32, #tpu.memory_space<vmem>>, vector<3x2xf32>
    %cst = arith.constant dense<0.000000e+00> : vector<128x2xf32>
    %2 = tpu.matmul %0, %1, %cst {dimension_numbers = #tpu.dot_dimension_numbers<[1], [0], [0], [1], [0, 0, 1, 1], [], []>} : vector<128x3xf32>, vector<3x2xf32>, vector<128x2xf32> -> vector<128x2xf32>
    %c0_3 = arith.constant 0 : index
    %c0_4 = arith.constant 0 : index
    %3 = vector.load %arg4[%c0_3, %c0_4] : memref<128x1xf32, #tpu.memory_space<vmem>>, vector<128x1xf32>
    %4 = vector.broadcast %3 : vector<128x1xf32> to vector<128x2xf32>
    %5 = arith.addf %2, %4 : vector<128x2xf32>
    %cst_5 = arith.constant 0.000000e+00 : f32
    %6 = vector.broadcast %cst_5 : f32 to vector<128x2xf32>
    %7 = arith.maximumf %5, %6 : vector<128x2xf32>
    %c0_6 = arith.constant 0 : index
    %c0_7 = arith.constant 0 : index
    %8 = vector.load %arg5[%c0_6, %c0_7] : memref<1x128xf32, #tpu.memory_space<vmem>>, vector<1x128xf32>
    %cst_8 = arith.constant dense<0.000000e+00> : vector<1x2xf32>
    %9 = tpu.matmul %8, %7, %cst_8 {dimension_numbers = #tpu.dot_dimension_numbers<[1], [0], [0], [1], [0, 0, 1, 1], [], []>} : vector<1x128xf32>, vector<128x2xf32>, vector<1x2xf32> -> vector<1x2xf32>
    %c0_9 = arith.constant 0 : index
    %c0_10 = arith.constant 0 : index
    %10 = vector.load %arg6[%c0_9, %c0_10] : memref<1x1xf32, #tpu.memory_space<vmem>>, vector<1x1xf32>
    %11 = vector.broadcast %10 : vector<1x1xf32> to vector<1x2xf32>
    %12 = arith.addf %9, %11 : vector<1x2xf32>
    %13 = math.tanh %12 : vector<1x2xf32>
    %c0_11 = arith.constant 0 : index
    %c0_12 = arith.constant 0 : index
    %14 = memref.load %arg1[%c0_11, %c0_12] : memref<1x1xf32, #tpu.memory_space<smem>>
    %15 = vector.broadcast %14 : f32 to vector<1x2xf32>
    %16 = arith.mulf %13, %15 : vector<1x2xf32>
    %c0_13 = arith.constant 0 : index
    %c0_14 = arith.constant 0 : index
    %17 = vector.load %arg7[%c0_13, %c0_14] : memref<1x2xf32, #tpu.memory_space<vmem>>, vector<1x2xf32>
    tpu.vector_store %arg7[%c0_13, %c0_14], %16 {strides = array<i32>} : memref<1x2xf32, #tpu.memory_space<vmem>>, vector<1x2xf32>,
    return
  }
  func.func @transform_0(%arg0: i32) -> (i32, i32) {
    %c0_i32 = arith.constant 0 : i32
    %c0_i32_0 = arith.constant 0 : i32
    %c0_i32_1 = arith.constant 0 : i32
    return %c0_i32, %c0_i32_0 : i32, i32
  }
  func.func @transform_1(%arg0: i32) -> (i32, i32) {
    %c0_i32 = arith.constant 0 : i32
    %c0_i32_0 = arith.constant 0 : i32
    return %c0_i32, %arg0 : i32, i32
  }
  func.func @transform_2(%arg0: i32) -> (i32, i32) {
    %c0_i32 = arith.constant 0 : i32
    %c0_i32_0 = arith.constant 0 : i32
    %c0_i32_1 = arith.constant 0 : i32
    return %c0_i32, %c0_i32_0 : i32, i32
  }
  func.func @transform_3(%arg0: i32) -> (i32, i32) {
    %c0_i32 = arith.constant 0 : i32
    %c0_i32_0 = arith.constant 0 : i32
    %c0_i32_1 = arith.constant 0 : i32
    return %c0_i32, %c0_i32_0 : i32, i32
  }
  func.func @transform_4(%arg0: i32) -> (i32, i32) {
    %c0_i32 = arith.constant 0 : i32
    %c0_i32_0 = arith.constant 0 : i32
    %c0_i32_1 = arith.constant 0 : i32
    return %c0_i32, %c0_i32_0 : i32, i32
  }
  func.func @transform_5(%arg0: i32) -> (i32, i32) {
    %c0_i32 = arith.constant 0 : i32
    %c0_i32_0 = arith.constant 0 : i32
    %c0_i32_1 = arith.constant 0 : i32
    return %c0_i32, %c0_i32_0 : i32, i32
  }
  func.func @transform_6(%arg0: i32) -> (i32, i32) {
    %c0_i32 = arith.constant 0 : i32
    %c0_i32_0 = arith.constant 0 : i32
    return %c0_i32, %arg0 : i32, i32
  }
}

</mosaic_0001>

<llo_original>
// kernel: tpu_custom_call.1
$region0: #{tpu_custom_call.1}
  #allocation0 [shape = 'u32[]', space=smem, size = 0x4, offset = 0x4, fixed_abs, tag = 'smem constant byte address 0x4 - core index']
  #allocation1 [shape = 'u32[144,128]{1,0:T(1,128)}', space=vmem, size = 0x12000, scoped, tag = 'internal scratch']
  #allocation2 [shape = 'f32[1,1]{1,0:T(1,128)S(6)}', space=smem, size = 0x200, scoped, tag = 'scoped memory for tpu_custom_call.1']
  #allocation3 [shape = 'f32[1,1]{1,0:T(1,128)S(1)}', space=vmem, size = 0x200, scoped, tag = 'scoped memory for tpu_custom_call.1']
  %s0 = inlined_call_operand.<no memory space> [shape: f32[1,1], index: 0, kind: input, shape index: {}]
  %s1 = inlined_call_operand.vmem [shape: f32[3,2], index: 1, kind: input, shape index: {}]
  %s2 = inlined_call_operand.vmem [shape: f32[128,3], index: 2, kind: input, shape index: {}]
  %s3 = inlined_call_operand.vmem [shape: f32[128,1], index: 3, kind: input, shape index: {}]
  %s4 = inlined_call_operand.vmem [shape: f32[1,128], index: 4, kind: input, shape index: {}]
  %s5 = inlined_call_operand.<no memory space> [shape: f32[1,1], index: 5, kind: input, shape index: {}]
  %s6 = inlined_call_operand.hbm [shape: f32[1,2], index: 6, kind: output, shape index: {}]
  %s7 = sld [smem:[#allocation0]]
  $region34: #{tpu_custom_call.1} parent=0
    _
  %s9 = ssub.s32 1, %s7
  %s10 = scalar_select 0, %s9, %s7
  %11 = sst [smem:[#allocation2]] %s0
  %v12 = vstv %s5
  %13 = vst [vmem:[#allocation3] sm:$0x1] %v12
  $region1: #{tpu_custom_call.1} parent=0
    #allocation4 [shape = 'u8[512]{0}', space=vmem, size = 0x400, scoped, tag = 'output window, operand 0, single buffered']
    #allocation5 [shape = 's32[1]{0}', space=sflag, size = 0x4, scoped, tag = 'scoped memory for tpu_custom_call.1']
    %14 = vsyncpa [#allocation5], 0
    // Predicated region
    $region2: #{tpu_custom_call.1} parent=1 // pred_check
      _
    $region3: #{tpu_custom_call.1} parent=1 // pred_check_branch
      %16 = sbr.rel (0) target = $region5
    $region4: #{tpu_custom_call.1} parent=1 // pred_region
      _
    $region5: #{tpu_custom_call.1} parent=1 // pred_fallthru
      _
    // Predicated region
    $region6: #{tpu_custom_call.1} parent=1 // pred_check
      _
    $region7: #{tpu_custom_call.1} parent=1 // pred_check_branch
      %18 = sbr.rel (0) target = $region9
    $region8: #{tpu_custom_call.1} parent=1 // pred_region
      _
    $region9: #{tpu_custom_call.1} parent=1 // pred_fallthru
      _
    // Predicated region
    $region10: #{tpu_custom_call.1} parent=1 // pred_check
      _
    $region11: #{tpu_custom_call.1} parent=1 // pred_check_branch
      %20 = sbr.rel (0) target = $region13
    $region12: #{tpu_custom_call.1} parent=1 // pred_region
      _
    $region13: #{tpu_custom_call.1} parent=1 // pred_fallthru
      _
    // Predicated region
    $region14: #{tpu_custom_call.1} parent=1 // pred_check
      _
    $region15: #{tpu_custom_call.1} parent=1 // pred_check_branch
      %22 = sbr.rel (0) target = $region17
    $region16: #{tpu_custom_call.1} parent=1 // pred_region
      _
    $region17: #{tpu_custom_call.1} parent=1 // pred_fallthru
      _
    // Predicated region
    $region18: #{tpu_custom_call.1} parent=1 // pred_check
      _
    $region19: #{tpu_custom_call.1} parent=1 // pred_check_branch
      %24 = sbr.rel (0) target = $region21
    $region20: #{tpu_custom_call.1} parent=1 // pred_region
      _
    $region21: #{tpu_custom_call.1} parent=1 // pred_fallthru
      _
    // Predicated region
    $region22: #{tpu_custom_call.1} parent=1 // pred_check
      _
    $region23: #{tpu_custom_call.1} parent=1 // pred_check_branch
      %26 = sbr.rel (0) target = $region25
    $region24: #{tpu_custom_call.1} parent=1 // pred_region
      _
    $region25: #{tpu_custom_call.1} parent=1 // pred_fallthru
      _
    %v27 = vld [vmem:[%s2] sm:$0xff]
    %v28 = vld [vmem:[%s2 + $0x8] sm:$0xff]
    %v29 = vld [vmem:[%s2 + $0x10] sm:$0xff]
    %v30 = vld [vmem:[%s2 + $0x18] sm:$0xff]
    %v31 = vld [vmem:[%s2 + $0x20] sm:$0xff]
    %v32 = vld [vmem:[%s2 + $0x28] sm:$0xff]
    %v33 = vld [vmem:[%s2 + $0x30] sm:$0xff]
    %v34 = vld [vmem:[%s2 + $0x38] sm:$0xff]
    %v35 = vld [vmem:[%s2 + $0x40] sm:$0xff]
    %v36 = vld [vmem:[%s2 + $0x48] sm:$0xff]
    %v37 = vld [vmem:[%s2 + $0x50] sm:$0xff]
    %v38 = vld [vmem:[%s2 + $0x58] sm:$0xff]
    %v39 = vld [vmem:[%s2 + $0x60] sm:$0xff]
    %v40 = vld [vmem:[%s2 + $0x68] sm:$0xff]
    %v41 = vld [vmem:[%s2 + $0x70] sm:$0xff]
    %v42 = vld [vmem:[%s2 + $0x78] sm:$0xff]
    %v43 = vld [vmem:[%s1] sm:$0x7]
    %v44 = vld [vmem:[%s3] sm:$0xff]
    %v45 = vld [vmem:[%s3 + $0x8] sm:$0xff]
    %v46 = vld [vmem:[%s3 + $0x10] sm:$0xff]
    %v47 = vld [vmem:[%s3 + $0x18] sm:$0xff]
    %v48 = vld [vmem:[%s3 + $0x20] sm:$0xff]
    %v49 = vld [vmem:[%s3 + $0x28] sm:$0xff]
    %v50 = vld [vmem:[%s3 + $0x30] sm:$0xff]
    %v51 = vld [vmem:[%s3 + $0x38] sm:$0xff]
    %v52 = vld [vmem:[%s3 + $0x40] sm:$0xff]
    %v53 = vld [vmem:[%s3 + $0x48] sm:$0xff]
    %v54 = vld [vmem:[%s3 + $0x50] sm:$0xff]
    %v55 = vld [vmem:[%s3 + $0x58] sm:$0xff]
    %v56 = vld [vmem:[%s3 + $0x60] sm:$0xff]
    %v57 = vld [vmem:[%s3 + $0x68] sm:$0xff]
    %v58 = vld [vmem:[%s3 + $0x70] sm:$0xff]
    %v59 = vld [vmem:[%s3 + $0x78] sm:$0xff]
    %61 = vset.pattern.permute.xlu0 0
    %62 = vperm.xlu0 %61, %v44
    %v63 = vpop.permute.xlu0 %62
    %66 = vset.pattern.permute.xlu0 0
    %67 = vperm.xlu0 %66, %v45
    %v68 = vpop.permute.xlu0 %67
    %71 = vset.pattern.permute.xlu0 0
    %72 = vperm.xlu0 %71, %v46
    %v73 = vpop.permute.xlu0 %72
    %76 = vset.pattern.permute.xlu0 0
    %77 = vperm.xlu0 %76, %v47
    %v78 = vpop.permute.xlu0 %77
    %81 = vset.pattern.permute.xlu0 0
    %82 = vperm.xlu0 %81, %v48
    %v83 = vpop.permute.xlu0 %82
    %86 = vset.pattern.permute.xlu0 0
    %87 = vperm.xlu0 %86, %v49
    %v88 = vpop.permute.xlu0 %87
    %91 = vset.pattern.permute.xlu0 0
    %92 = vperm.xlu0 %91, %v50
    %v93 = vpop.permute.xlu0 %92
    %96 = vset.pattern.permute.xlu0 0
    %97 = vperm.xlu0 %96, %v51
    %v98 = vpop.permute.xlu0 %97
    %101 = vset.pattern.permute.xlu0 0
    %102 = vperm.xlu0 %101, %v52
    %v103 = vpop.permute.xlu0 %102
    %106 = vset.pattern.permute.xlu0 0
    %107 = vperm.xlu0 %106, %v53
    %v108 = vpop.permute.xlu0 %107
    %111 = vset.pattern.permute.xlu0 0
    %112 = vperm.xlu0 %111, %v54
    %v113 = vpop.permute.xlu0 %112
    %116 = vset.pattern.permute.xlu0 0
    %117 = vperm.xlu0 %116, %v55
    %v118 = vpop.permute.xlu0 %117
    %121 = vset.pattern.permute.xlu0 0
    %122 = vperm.xlu0 %121, %v56
    %v123 = vpop.permute.xlu0 %122
    %126 = vset.pattern.permute.xlu0 0
    %127 = vperm.xlu0 %126, %v57
    %v128 = vpop.permute.xlu0 %127
    %131 = vset.pattern.permute.xlu0 0
    %132 = vperm.xlu0 %131, %v58
    %v133 = vpop.permute.xlu0 %132
    %136 = vset.pattern.permute.xlu0 0
    %137 = vperm.xlu0 %136, %v59
    %v138 = vpop.permute.xlu0 %137
    %vm140 = vcmask 23552
    %v142 = vsel %vm140, %v27, 0
    %v145 = vsel %vm140, %v28, 0
    %v148 = vsel %vm140, %v29, 0
    %v151 = vsel %vm140, %v30, 0
    %v154 = vsel %vm140, %v31, 0
    %v157 = vsel %vm140, %v32, 0
    %v160 = vsel %vm140, %v33, 0
    %v163 = vsel %vm140, %v34, 0
    %v166 = vsel %vm140, %v35, 0
    %v169 = vsel %vm140, %v36, 0
    %v172 = vsel %vm140, %v37, 0
    %v175 = vsel %vm140, %v38, 0
    %v178 = vsel %vm140, %v39, 0
    %v181 = vsel %vm140, %v40, 0
    %v184 = vsel %vm140, %v41, 0
    %v187 = vsel %vm140, %v42, 0
    %vm189 = vcmask 1042432
    %v191 = vsel %vm189, %v43, 0
    %193 = vmatprep.subr.mxu0 0.0
    %194 = vmatpush1.msra.mxu0 %v191
    %195 = vmatprep.subr.mxu0 0.0
    %196 = vmatpush1.msra.mxu0 0.0
    %197 = vmatprep.subr.mxu0 0.0
    %198 = vmatpush1.msra.mxu0 0.0
    %199 = vmatprep.subr.mxu0 0.0
    %200 = vmatpush1.msra.mxu0 0.0
    %201 = vmatprep.subr.mxu0 0.0
    %202 = vmatpush1.msra.mxu0 0.0
    %203 = vmatprep.subr.mxu0 0.0
    %204 = vmatpush1.msra.mxu0 0.0
    %205 = vmatprep.subr.mxu0 0.0
    %206 = vmatpush1.msra.mxu0 0.0
    %207 = vmatprep.subr.mxu0 0.0
    %208 = vmatpush1.msra.mxu0 0.0
    %209 = vmatprep.subr.mxu0 0.0
    %210 = vmatpush1.msra.mxu0 0.0
    %211 = vmatprep.subr.mxu0 0.0
    %212 = vmatpush1.msra.mxu0 0.0
    %213 = vmatprep.subr.mxu0 0.0
    %214 = vmatpush1.msra.mxu0 0.0
    %215 = vmatprep.subr.mxu0 0.0
    %216 = vmatpush1.msra.mxu0 0.0
    %217 = vmatprep.subr.mxu0 0.0
    %218 = vmatpush1.msra.mxu0 0.0
    %219 = vmatprep.subr.mxu0 0.0
    %220 = vmatpush1.msra.mxu0 0.0
    %221 = vmatprep.subr.mxu0 0.0
    %222 = vmatpush1.msra.mxu0 0.0
    %223 = vmatprep.subr.mxu0 0.0
    %224 = vmatpush1.msra.mxu0 0.0
    %225 = vmatprep.subr.mxu0 0.0
    %226 = vmatpush1.msra.mxu0 0.0
    %227 = vmatprep.subr.mxu0 0.0
    %228 = vmatpush1.msra.mxu0 0.0
    %229 = vmatprep.subr.mxu0 0.0
    %230 = vmatpush1.msra.mxu0 0.0
    %231 = vmatprep.subr.mxu0 0.0
    %232 = vmatpush1.msra.mxu0 0.0
    %233 = vmatprep.subr.mxu0 0.0
    %234 = vmatpush1.msra.mxu0 0.0
    %235 = vmatprep.subr.mxu0 0.0
    %236 = vmatpush1.msra.mxu0 0.0
    %237 = vmatprep.subr.mxu0 0.0
    %238 = vmatpush1.msra.mxu0 0.0
    %239 = vmatprep.subr.mxu0 0.0
    %240 = vmatpush1.msra.mxu0 0.0
    %241 = vmatprep.subr.mxu0 0.0
    %242 = vmatpush1.msra.mxu0 0.0
    %243 = vmatprep.subr.mxu0 0.0
    %244 = vmatpush1.msra.mxu0 0.0
    %245 = vmatprep.subr.mxu0 0.0
    %246 = vmatpush1.msra.mxu0 0.0
    %247 = vmatprep.subr.mxu0 0.0
    %248 = vmatpush1.msra.mxu0 0.0
    %249 = vmatprep.subr.mxu0 0.0
    %250 = vmatpush1.msra.mxu0 0.0
    %251 = vmatprep.subr.mxu0 0.0
    %252 = vmatpush1.msra.mxu0 0.0
    %253 = vmatprep.subr.mxu0 0.0
    %254 = vmatpush1.msra.mxu0 0.0
    %255 = vmatprep.subr.mxu0 0.0
    %256 = vmatpush1.msra.mxu0 0.0
    %257 = vmatprep.mubr.f32.mxu0 0.0
    %258 = vmatmul.mubr.f32.gmra.mrb[0].mxu0 %v142
    %v259 = vpop.f32.mrb[0].mxu0
    %v260 = vadd.f32 %v63, %v259
    %v261 = vpop.f32.mrb[0].mxu0
    %262 = vmatprep.mubr.f32.mxu0 0.0
    %263 = vmatmul.mubr.f32.gmra.mrb[0].mxu0 %v145
    %v264 = vpop.f32.mrb[0].mxu0
    %v265 = vadd.f32 %v68, %v264
    %v266 = vpop.f32.mrb[0].mxu0
    %267 = vmatprep.mubr.f32.mxu0 0.0
    %268 = vmatmul.mubr.f32.gmra.mrb[0].mxu0 %v148
    %v269 = vpop.f32.mrb[0].mxu0
    %v270 = vadd.f32 %v73, %v269
    %v271 = vpop.f32.mrb[0].mxu0
    %272 = vmatprep.mubr.f32.mxu0 0.0
    %273 = vmatmul.mubr.f32.gmra.mrb[0].mxu0 %v151
    %v274 = vpop.f32.mrb[0].mxu0
    %v275 = vadd.f32 %v78, %v274
    %v276 = vpop.f32.mrb[0].mxu0
    %277 = vmatprep.mubr.f32.mxu0 0.0
    %278 = vmatmul.mubr.f32.gmra.mrb[0].mxu0 %v154
    %v279 = vpop.f32.mrb[0].mxu0
    %v280 = vadd.f32 %v83, %v279
    %v281 = vpop.f32.mrb[0].mxu0
    %282 = vmatprep.mubr.f32.mxu0 0.0
    %283 = vmatmul.mubr.f32.gmra.mrb[0].mxu0 %v157
    %v284 = vpop.f32.mrb[0].mxu0
    %v285 = vadd.f32 %v88, %v284
    %v286 = vpop.f32.mrb[0].mxu0
    %287 = vmatprep.mubr.f32.mxu0 0.0
    %288 = vmatmul.mubr.f32.gmra.mrb[0].mxu0 %v160
    %v289 = vpop.f32.mrb[0].mxu0
    %v290 = vadd.f32 %v93, %v289
    %v291 = vpop.f32.mrb[0].mxu0
    %292 = vmatprep.mubr.f32.mxu0 0.0
    %293 = vmatmul.mubr.f32.gmra.mrb[0].mxu0 %v163
    %v294 = vpop.f32.mrb[0].mxu0
    %v295 = vadd.f32 %v98, %v294
    %v296 = vpop.f32.mrb[0].mxu0
    %297 = vmatprep.mubr.f32.mxu0 0.0
    %298 = vmatmul.mubr.f32.gmra.mrb[0].mxu0 %v166
    %v299 = vpop.f32.mrb[0].mxu0
    %v300 = vadd.f32 %v103, %v299
    %v301 = vpop.f32.mrb[0].mxu0
    %302 = vmatprep.mubr.f32.mxu0 0.0
    %303 = vmatmul.mubr.f32.gmra.mrb[0].mxu0 %v169
    %v304 = vpop.f32.mrb[0].mxu0
    %v305 = vadd.f32 %v108, %v304
    %v306 = vpop.f32.mrb[0].mxu0
    %307 = vmatprep.mubr.f32.mxu0 0.0
    %308 = vmatmul.mubr.f32.gmra.mrb[0].mxu0 %v172
    %v309 = vpop.f32.mrb[0].mxu0
    %v310 = vadd.f32 %v113, %v309
    %v311 = vpop.f32.mrb[0].mxu0
    %312 = vmatprep.mubr.f32.mxu0 0.0
    %313 = vmatmul.mubr.f32.gmra.mrb[0].mxu0 %v175
    %v314 = vpop.f32.mrb[0].mxu0
    %v315 = vadd.f32 %v118, %v314
    %v316 = vpop.f32.mrb[0].mxu0
    %317 = vmatprep.mubr.f32.mxu0 0.0
    %318 = vmatmul.mubr.f32.gmra.mrb[0].mxu0 %v178
    %v319 = vpop.f32.mrb[0].mxu0
    %v320 = vadd.f32 %v123, %v319
    %v321 = vpop.f32.mrb[0].mxu0
    %322 = vmatprep.mubr.f32.mxu0 0.0
    %323 = vmatmul.mubr.f32.gmra.mrb[0].mxu0 %v181
    %v324 = vpop.f32.mrb[0].mxu0
    %v325 = vadd.f32 %v128, %v324
    %v326 = vpop.f32.mrb[0].mxu0
    %327 = vmatprep.mubr.f32.mxu0 0.0
    %328 = vmatmul.mubr.f32.gmra.mrb[0].mxu0 %v184
    %v329 = vpop.f32.mrb[0].mxu0
    %v330 = vadd.f32 %v133, %v329
    %v331 = vpop.f32.mrb[0].mxu0
    %332 = vmatprep.mubr.f32.mxu0 0.0
    %333 = vmatmul.mubr.f32.gmra.mrb[0].mxu0 %v187
    %v334 = vpop.f32.mrb[0].mxu0
    %v335 = vadd.f32 %v138, %v334
    %v336 = vpop.f32.mrb[0].mxu0
    %337 = vdwg.mxu0
    %v338 = vmax.f32 %v260, 0.0
    %v339 = vmax.f32 %v265, 0.0
    %v340 = vmax.f32 %v270, 0.0
    %v341 = vmax.f32 %v275, 0.0
    %v342 = vmax.f32 %v280, 0.0
    %v343 = vmax.f32 %v285, 0.0
    %v344 = vmax.f32 %v290, 0.0
    %v345 = vmax.f32 %v295, 0.0
    %v346 = vmax.f32 %v300, 0.0
    %v347 = vmax.f32 %v305, 0.0
    %v348 = vmax.f32 %v310, 0.0
    %v349 = vmax.f32 %v315, 0.0
    %v350 = vmax.f32 %v320, 0.0
    %v351 = vmax.f32 %v325, 0.0
    %v352 = vmax.f32 %v330, 0.0
    %v353 = vmax.f32 %v335, 0.0
    %v354 = vld [vmem:[%s4] sm:$0x1]
    %v355 = vld [vmem:[#allocation3] sm:$0x1]
    %357 = vset.pattern.permute.xlu0 0
    %358 = vperm.xlu0 %357, %v355
    %v359 = vpop.permute.xlu0 %358
    %v361 = vlaneseq
    %v362 = vshrl.u32 %v361, 7
    %v363 = vsub.s32 0, %v362
    %v364 = vrot.slane %v359, %v363
    %365 = vmatprep.subr.mxu0 0.0
    %366 = vmatpush1.msra.mxu0 %v338
    %367 = vmatprep.subr.mxu0 0.0
    %368 = vmatpush1.msra.mxu0 %v339
    %369 = vmatprep.subr.mxu0 0.0
    %370 = vmatpush1.msra.mxu0 %v340
    %371 = vmatprep.subr.mxu0 0.0
    %372 = vmatpush1.msra.mxu0 %v341
    %373 = vmatprep.subr.mxu0 0.0
    %374 = vmatpush1.msra.mxu0 %v342
    %375 = vmatprep.subr.mxu0 0.0
    %376 = vmatpush1.msra.mxu0 %v343
    %377 = vmatprep.subr.mxu0 0.0
    %378 = vmatpush1.msra.mxu0 %v344
    %379 = vmatprep.subr.mxu0 0.0
    %380 = vmatpush1.msra.mxu0 %v345
    %381 = vmatprep.subr.mxu0 0.0
    %382 = vmatpush1.msra.mxu0 %v346
    %383 = vmatprep.subr.mxu0 0.0
    %384 = vmatpush1.msra.mxu0 %v347
    %385 = vmatprep.subr.mxu0 0.0
    %386 = vmatpush1.msra.mxu0 %v348
    %387 = vmatprep.subr.mxu0 0.0
    %388 = vmatpush1.msra.mxu0 %v349
    %389 = vmatprep.subr.mxu0 0.0
    %390 = vmatpush1.msra.mxu0 %v350
    %391 = vmatprep.subr.mxu0 0.0
    %392 = vmatpush1.msra.mxu0 %v351
    %393 = vmatprep.subr.mxu0 0.0
    %394 = vmatpush1.msra.mxu0 %v352
    %395 = vmatprep.subr.mxu0 0.0
    %396 = vmatpush1.msra.mxu0 %v353
    %397 = vmatprep.subr.mxu0 0.0
    %398 = vmatpush1.msra.mxu0 0.0
    %399 = vmatprep.subr.mxu0 0.0
    %400 = vmatpush1.msra.mxu0 0.0
    %401 = vmatprep.subr.mxu0 0.0
    %402 = vmatpush1.msra.mxu0 0.0
    %403 = vmatprep.subr.mxu0 0.0
    %404 = vmatpush1.msra.mxu0 0.0
    %405 = vmatprep.subr.mxu0 0.0
    %406 = vmatpush1.msra.mxu0 0.0
    %407 = vmatprep.subr.mxu0 0.0
    %408 = vmatpush1.msra.mxu0 0.0
    %409 = vmatprep.subr.mxu0 0.0
    %410 = vmatpush1.msra.mxu0 0.0
    %411 = vmatprep.subr.mxu0 0.0
    %412 = vmatpush1.msra.mxu0 0.0
    %413 = vmatprep.subr.mxu0 0.0
    %414 = vmatpush1.msra.mxu0 0.0
    %415 = vmatprep.subr.mxu0 0.0
    %416 = vmatpush1.msra.mxu0 0.0
    %417 = vmatprep.subr.mxu0 0.0
    %418 = vmatpush1.msra.mxu0 0.0
    %419 = vmatprep.subr.mxu0 0.0
    %420 = vmatpush1.msra.mxu0 0.0
    %421 = vmatprep.subr.mxu0 0.0
    %422 = vmatpush1.msra.mxu0 0.0
    %423 = vmatprep.subr.mxu0 0.0
    %424 = vmatpush1.msra.mxu0 0.0
    %425 = vmatprep.subr.mxu0 0.0
    %426 = vmatpush1.msra.mxu0 0.0
    %427 = vmatprep.subr.mxu0 0.0
    %428 = vmatpush1.msra.mxu0 0.0
    %429 = vmatprep.mubr.f32.mxu0 0.0
    %430 = vmatmul.mubr.f32.gmra.mrb[0].mxu0 %v354
    %v431 = vpop.f32.mrb[0].mxu0
    %v432 = vadd.f32 %v364, %v431
    %v433 = vpop.f32.mrb[0].mxu0
    %434 = vdwg.mxu0
    %v435 = vtanh.pop %v432
    %s436 = sld [smem:[#allocation2]]
    %v437 = vstv %s436
    %v438 = vmul.f32 %v435, %v437
    %vm439 = vcmask 8192
    %440 = vst.msk [vmem:[#allocation4] sm:$0x1] %vm439, %v438
    // Predicated region
    $region26: #{tpu_custom_call.1} parent=1 // pred_check
      _
    $region27: #{tpu_custom_call.1} parent=1 // pred_check_branch
      %442 = sbr.rel (0) target = $region29
    $region28: #{tpu_custom_call.1} parent=1 // pred_region
      %s444 = ssub.s32 16, 16
      %445 = vsyncadd [#allocation5], %s444
      %s447 = sshll.u32 [#allocation4], 4
      %s448 = int_to_ptr.vmem [resolvable:$true] %s447
      %450 = dma.vmem_to_hbm [thread:$0]  %s448, 16, %s6, [#allocation5]
    $region29: #{tpu_custom_call.1} parent=1 // pred_fallthru
      _
    // Predicated region
    $region30: #{tpu_custom_call.1} parent=1 // pred_check
      _
    $region31: #{tpu_custom_call.1} parent=1 // pred_check_branch
      %452 = sbr.rel (0) target = $region33
    $region32: #{tpu_custom_call.1} parent=1 // pred_region
      %453 = dma.done [#allocation5], 16
    $region33: #{tpu_custom_call.1} parent=1 // pred_fallthru
      _
    %454 = vsyncpa [#allocation5], 1

</llo_original>
